<compile_context>
chip_gen: v7x
topology: tpu7x:2x2x1
jax: 0.10.0
libtpu: 0.0.40
codegen_flags: <defaults>
</compile_context>

<pallas_src>
import jax
import jax.numpy as jnp
from jax.experimental import pallas as pl
from jax.experimental.pallas import tpu as pltpu

IN_DIM = 300
HID_DIM = 256
OUT_DIM = 1

_TILE_CAP = 4096      # rows per streamed x tile: 4096*300 f32 ~= 4.7 MiB / buffer
_TILE_ALIGN = 256     # MXU-friendly M (multiple of 128) and sublane-aligned
_VMEM_LIMIT = 32 * 1024 * 1024   # explicit scoped-VMEM limit, safe on v5e/v6e/v7x


def _discriminator_kernel(x_ref, w1_ref, bw_ref, b2_ref, o_ref):
    # x_ref : (TB, 300)  f32   VMEM  (streamed batch tile; cast to bf16 in-register)
    # w1_ref: (300, 256) bf16  VMEM  (resident)
    # bw_ref: (2, 256)   f32   VMEM  (resident; row 0 = b1, row 1 = w2^T)
    # b2_ref: (1, 1)     f32   SMEM  (scalar)
    # o_ref : (TB, 1)    f32   VMEM
    x = x_ref[...].astype(jnp.bfloat16)          # VPU cast, feeds the MXU directly
    bw = bw_ref[...]
    # Linear(300 -> 256): bf16 MXU matmul, f32 accumulation, bias + ReLU on the VPU.
    h = jnp.dot(x, w1_ref[...], preferred_element_type=jnp.float32)
    h = jnp.maximum(h + bw[0:1, :], 0.0)
    # Linear(256 -> 1): N=1, so skip the MXU — VPU elementwise mul + XLU lane reduce.
    y = jnp.sum(h * bw[1:2, :], axis=-1, keepdims=True) + b2_ref[0, 0]
    o_ref[...] = y.astype(o_ref.dtype)


def _round_up(n, m):
    return ((n + m - 1) // m) * m


def _pick_batch_tile(B, cap=_TILE_CAP, align=_TILE_ALIGN, min_blocks=2):
    """Pick a batch tile that (a) is big enough to amortize the ~0.35us per-grid-step
    overhead, (b) is 128-aligned for clean MXU passes, (c) keeps double-buffered f32
    x tiles small vs. v7x's 64 MiB VMEM, and (d) splits B > 256 into >= 2 blocks so
    the 'parallel' grid axis can shard across v7x's two TensorCores.  Any B works:
    ragged tails are handled by the pl.cdiv grid with masked tail blocks."""
    if B <= align:
        return B                                   # single full block (block dims == array dims)
    tile = min(cap, _round_up(pl.cdiv(B, min_blocks), align))
    return min(tile, _round_up(B, align))


def discriminator_forward(x, w1, b1, w2, b2, *, batch_tile=None):
    B, F = x.shape
    assert F == IN_DIM
    if batch_tile is None:
        batch_tile = _pick_batch_tile(B)
    assert batch_tile % 8 == 0 or batch_tile == B, (
        "batch_tile must be a multiple of 8 (sublane constraint) or equal the full batch")

    x_f32 = jnp.asarray(x, jnp.float32)                    # streamed as-is; cast happens in-kernel
    w1_bf16 = jnp.asarray(w1).astype(jnp.bfloat16)         # tiny resident weight, fetched once
    b1_row = jnp.asarray(b1, jnp.float32).reshape(1, HID_DIM)
    w2_row = jnp.asarray(w2, jnp.float32).reshape(HID_DIM, OUT_DIM).T   # (1, 256)
    bw = jnp.concatenate([b1_row, w2_row], axis=0)         # (2, 256) packed resident operand
    b2_s = jnp.asarray(b2, jnp.float32).reshape(1, 1)

    grid = (pl.cdiv(B, batch_tile),)                       # masked tail block if B % tile != 0

    flops = 2 * B * IN_DIM * HID_DIM + 3 * B * HID_DIM
    bytes_accessed = (B * IN_DIM * 4            # x  (f32, single HBM read)
                      + IN_DIM * HID_DIM * 2    # W1 (bf16, resident)
                      + 2 * HID_DIM * 4         # packed b1 / w2 row
                      + 4                       # b2
                      + B * OUT_DIM * 4)        # output (f32)

    return pl.pallas_call(
        _discriminator_kernel,
        out_shape=jax.ShapeDtypeStruct((B, OUT_DIM), jnp.float32),
        grid_spec=pltpu.PrefetchScalarGridSpec(
            num_scalar_prefetch=0,
            grid=grid,
            in_specs=[
                pl.BlockSpec((batch_tile, IN_DIM), lambda i: (i, 0)),     # x  (streamed)
                pl.BlockSpec((IN_DIM, HID_DIM), lambda i: (0, 0)),        # W1 (resident)
                pl.BlockSpec((2, HID_DIM), lambda i: (0, 0)),             # b1 + w2 row (resident)
                pl.BlockSpec(memory_space=pltpu.MemorySpace.SMEM),        # b2 (scalar)
            ],
            out_specs=pl.BlockSpec((batch_tile, OUT_DIM), lambda i: (i, 0)),
        ),
        compiler_params=pltpu.CompilerParams(
            dimension_semantics=("parallel",),
            vmem_limit_bytes=_VMEM_LIMIT,
        ),
        cost_estimate=pl.CostEstimate(
            flops=flops, transcendentals=0, bytes_accessed=bytes_accessed),
    )(x_f32, w1_bf16, bw, b2_s)


def init_params(key):
    # Deterministic init matching PyTorch nn.Linear default: U(-1/sqrt(fan_in), +1/sqrt(fan_in))
    k1, k2, k3, k4 = jax.random.split(key, 4)
    lim1 = 1.0 / jnp.sqrt(jnp.float32(IN_DIM))
    lim2 = 1.0 / jnp.sqrt(jnp.float32(HID_DIM))
    w1 = jax.random.uniform(k1, (IN_DIM, HID_DIM), jnp.float32, -lim1, lim1)
    b1 = jax.random.uniform(k2, (1, HID_DIM), jnp.float32, -lim1, lim1)
    w2 = jax.random.uniform(k3, (HID_DIM, OUT_DIM), jnp.float32, -lim2, lim2)
    b2 = jax.random.uniform(k4, (1, OUT_DIM), jnp.float32, -lim2, lim2)
    return w1, b1, w2, b2


def reference_forward(x, w1, b1, w2, b2):
    """Pure-f32 reference (PyTorch semantics)."""
    h = jnp.maximum(x @ w1 + b1.reshape(1, HID_DIM), 0.0)
    return h @ w2.reshape(HID_DIM, OUT_DIM) + b2.reshape(1, OUT_DIM)


def reference_forward_bf16(x, w1, b1, w2, b2):
    """Reference matching the kernel's bf16-input / f32-accumulate numerics."""
    xb = x.astype(jnp.bfloat16).astype(jnp.float32)
    w1b = jnp.asarray(w1).astype(jnp.bfloat16).astype(jnp.float32)
    h = jnp.maximum(xb @ w1b + b1.reshape(1, HID_DIM), 0.0)
    return h @ w2.reshape(HID_DIM, OUT_DIM) + b2.reshape(1, OUT_DIM)


if __name__ == "__main__":
    key = jax.random.PRNGKey(0)
    kx, kp = jax.random.split(key)

    B = 8
    x = jax.random.normal(kx, (B, IN_DIM), jnp.float32)
    w1, b1, w2, b2 = init_params(kp)

    out = discriminator_forward(x, w1, b1, w2, b2)
    out = jax.block_until_ready(out)
    assert out.shape == (B, OUT_DIM)

    ref_bf16 = reference_forward_bf16(x, w1, b1, w2, b2)
    assert jnp.allclose(out, ref_bf16, atol=5e-3, rtol=5e-3), "mismatch vs bf16-consistent reference"

    ref_f32 = reference_forward(x, w1, b1, w2, b2)
    assert jnp.allclose(out, ref_f32, atol=5e-2, rtol=5e-2), "mismatch vs f32 reference"

    print("KERNEL_OK")
</pallas_src>

<mosaic_0001>
module attributes {stable_mosaic.version = 11 : i64} {
  func.func @_discriminator_kernel(%arg0: i32, %arg1: memref<8x300xf32, #tpu.memory_space<vmem>>, %arg2: memref<300x256xbf16, #tpu.memory_space<vmem>>, %arg3: memref<2x256xf32, #tpu.memory_space<vmem>>, %arg4: memref<1x1xf32, #tpu.memory_space<smem>>, %arg5: memref<8x1xf32, #tpu.memory_space<vmem>>) attributes {dimension_semantics = [#tpu.dimension_semantics<parallel>], iteration_bounds = array<i64: 1>, scalar_prefetch = 0 : i64, scratch_operands = 0 : i64, tpu.core_type = #tpu.core_type<tc>, window_params = [{transform_indices = @transform_0, window_bounds = array<i64: 8, 300>}, {pipeline_mode = #tpu.pipeline_mode<synchronous>, transform_indices = @transform_1, window_bounds = array<i64: 300, 256>}, {pipeline_mode = #tpu.pipeline_mode<synchronous>, transform_indices = @transform_2, window_bounds = array<i64: 2, 256>}, {transform_indices = @transform_3, window_bounds = array<i64: 1, 1>}, {transform_indices = @transform_4, window_bounds = array<i64: 8, 1>}]} {
    %c0 = arith.constant 0 : index
    %c0_0 = arith.constant 0 : index
    %0 = vector.load %arg1[%c0, %c0_0] : memref<8x300xf32, #tpu.memory_space<vmem>>, vector<8x300xf32>
    %1 = arith.truncf %0 : vector<8x300xf32> to vector<8x300xbf16>
    %c0_1 = arith.constant 0 : index
    %c0_2 = arith.constant 0 : index
    %2 = vector.load %arg3[%c0_1, %c0_2] : memref<2x256xf32, #tpu.memory_space<vmem>>, vector<2x256xf32>
    %c0_3 = arith.constant 0 : index
    %c0_4 = arith.constant 0 : index
    %3 = vector.load %arg2[%c0_3, %c0_4] : memref<300x256xbf16, #tpu.memory_space<vmem>>, vector<300x256xbf16>
    %cst = arith.constant dense<0.000000e+00> : vector<8x256xf32>
    %4 = tpu.matmul %1, %3, %cst {dimension_numbers = #tpu.dot_dimension_numbers<[1], [0], [0], [1], [0, 0, 1, 1], [], []>} : vector<8x300xbf16>, vector<300x256xbf16>, vector<8x256xf32> -> vector<8x256xf32>
    %5 = vector.extract_strided_slice %2 {offsets = [0, 0], sizes = [1, 256], strides = [1, 1]} : vector<2x256xf32> to vector<1x256xf32>
    %6 = vector.broadcast %5 : vector<1x256xf32> to vector<8x256xf32>
    %7 = arith.addf %4, %6 : vector<8x256xf32>
    %cst_5 = arith.constant 0.000000e+00 : f32
    %8 = vector.broadcast %cst_5 : f32 to vector<8x256xf32>
    %9 = arith.maximumf %7, %8 : vector<8x256xf32>
    %10 = vector.extract_strided_slice %2 {offsets = [1, 0], sizes = [1, 256], strides = [1, 1]} : vector<2x256xf32> to vector<1x256xf32>
    %11 = vector.broadcast %10 : vector<1x256xf32> to vector<8x256xf32>
    %12 = arith.mulf %9, %11 : vector<8x256xf32>
    %cst_6 = arith.constant dense<0.000000e+00> : vector<8xf32>
    %13 = vector.multi_reduction <add>, %12, %cst_6 [1] : vector<8x256xf32> to vector<8xf32>
    %14 = vector.shape_cast %13 : vector<8xf32> to vector<8x1xf32>
    %c0_7 = arith.constant 0 : index
    %c0_8 = arith.constant 0 : index
    %15 = memref.load %arg4[%c0_7, %c0_8] : memref<1x1xf32, #tpu.memory_space<smem>>
    %16 = vector.broadcast %15 : f32 to vector<8x1xf32>
    %17 = arith.addf %14, %16 : vector<8x1xf32>
    %c0_9 = arith.constant 0 : index
    %c0_10 = arith.constant 0 : index
    %18 = vector.load %arg5[%c0_9, %c0_10] : memref<8x1xf32, #tpu.memory_space<vmem>>, vector<8x1xf32>
    tpu.vector_store %arg5[%c0_9, %c0_10], %17 {strides = array<i32>} : memref<8x1xf32, #tpu.memory_space<vmem>>, vector<8x1xf32>,
    return
  }
  func.func @transform_0(%arg0: i32) -> (i32, i32) {
    %c0_i32 = arith.constant 0 : i32
    %c0_i32_0 = arith.constant 0 : i32
    return %arg0, %c0_i32 : i32, i32
  }
  func.func @transform_1(%arg0: i32) -> (i32, i32) {
    %c0_i32 = arith.constant 0 : i32
    %c0_i32_0 = arith.constant 0 : i32
    %c0_i32_1 = arith.constant 0 : i32
    return %c0_i32, %c0_i32_0 : i32, i32
  }
  func.func @transform_2(%arg0: i32) -> (i32, i32) {
    %c0_i32 = arith.constant 0 : i32
    %c0_i32_0 = arith.constant 0 : i32
    %c0_i32_1 = arith.constant 0 : i32
    return %c0_i32, %c0_i32_0 : i32, i32
  }
  func.func @transform_3(%arg0: i32) -> (i32, i32) {
    %c0_i32 = arith.constant 0 : i32
    %c0_i32_0 = arith.constant 0 : i32
    %c0_i32_1 = arith.constant 0 : i32
    return %c0_i32, %c0_i32_0 : i32, i32
  }
  func.func @transform_4(%arg0: i32) -> (i32, i32) {
    %c0_i32 = arith.constant 0 : i32
    %c0_i32_0 = arith.constant 0 : i32
    return %arg0, %c0_i32 : i32, i32
  }
}

</mosaic_0001>

<llo_original>
// kernel: tpu_custom_call.1
$region0: #{tpu_custom_call.1}
  #allocation0 [shape = 'u32[]', space=smem, size = 0x4, offset = 0x4, fixed_abs, tag = 'smem constant byte address 0x4 - core index']
  #allocation1 [shape = 'u32[144,128]{1,0:T(1,128)}', space=vmem, size = 0x12000, scoped, tag = 'internal scratch']
  #allocation2 [shape = 'f32[1,1]{1,0:T(1,128)S(6)}', space=smem, size = 0x200, scoped, tag = 'scoped memory for tpu_custom_call.1']
  %s0 = inlined_call_operand.hbm [shape: f32[8,300], index: 0, kind: input, shape index: {}]
  %s1 = inlined_call_operand.hbm [shape: bf16[300,256], index: 1, kind: input, shape index: {}]
  %s2 = inlined_call_operand.vmem [shape: f32[2,256], index: 2, kind: input, shape index: {}]
  %s3 = inlined_call_operand.<no memory space> [shape: f32[1,1], index: 3, kind: input, shape index: {}]
  %s4 = inlined_call_operand.vmem [shape: f32[8,1], index: 4, kind: output, shape index: {}]
  %s5 = sld [smem:[#allocation0]]
  $region34: #{tpu_custom_call.1} parent=0
    _
  %s7 = ssub.s32 1, %s5
  %s8 = scalar_select 0, %s7, %s5
  %9 = sst [smem:[#allocation2]] %s3
  $region1: #{tpu_custom_call.1} parent=0
    #allocation3 [shape = 'u8[12288]{0}', space=vmem, size = 0x3000, scoped, tag = 'input window, operand 0, single buffered']
    #allocation4 [shape = 's32[1]{0}', space=sflag, size = 0x4, scoped, tag = 'scoped memory for tpu_custom_call.1']
    #allocation5 [shape = 'u8[155648]{0}', space=vmem, size = 0x26000, scoped, tag = 'input window, operand 1, single buffered']
    #allocation6 [shape = 's32[1]{0}', space=sflag, size = 0x4, scoped, tag = 'scoped memory for tpu_custom_call.1']
    %10 = vsyncpa [#allocation4], 0
    %11 = vsyncpa [#allocation6], 0
    // Predicated region
    $region2: #{tpu_custom_call.1} parent=1 // pred_check
      _
    $region3: #{tpu_custom_call.1} parent=1 // pred_check_branch
      %13 = sbr.rel (0) target = $region5
    $region4: #{tpu_custom_call.1} parent=1 // pred_region
      %s15 = ssub.s32 384, 384
      %16 = vsyncadd [#allocation4], %s15
      %s18 = sshll.u32 [#allocation3], 4
      %s19 = int_to_ptr.vmem [resolvable:$true] %s18
      %21 = dma.hbm_to_vmem [thread:$0]  %s0, 384, %s19, [#allocation4]
    $region5: #{tpu_custom_call.1} parent=1 // pred_fallthru
      _
    // Predicated region
    $region6: #{tpu_custom_call.1} parent=1 // pred_check
      _
    $region7: #{tpu_custom_call.1} parent=1 // pred_check_branch
      %23 = sbr.rel (0) target = $region9
    $region8: #{tpu_custom_call.1} parent=1 // pred_region
      %s25 = ssub.s32 4864, 4864
      %26 = vsyncadd [#allocation6], %s25
      %s27 = sshll.u32 [#allocation5], 4
      %s28 = int_to_ptr.vmem [resolvable:$true] %s27
      %33 = dma.hbm_to_vmem [thread:$0]  %s1, 4864, %s28, [#allocation6], 128, 128, 8
    $region9: #{tpu_custom_call.1} parent=1 // pred_fallthru
      _
    // Predicated region
    $region10: #{tpu_custom_call.1} parent=1 // pred_check
      _
    $region11: #{tpu_custom_call.1} parent=1 // pred_check_branch
      %35 = sbr.rel (0) target = $region13
    $region12: #{tpu_custom_call.1} parent=1 // pred_region
      _
    $region13: #{tpu_custom_call.1} parent=1 // pred_fallthru
      _
    // Predicated region
    $region14: #{tpu_custom_call.1} parent=1 // pred_check
      _
    $region15: #{tpu_custom_call.1} parent=1 // pred_check_branch
      %37 = sbr.rel (0) target = $region17
    $region16: #{tpu_custom_call.1} parent=1 // pred_region
      _
    $region17: #{tpu_custom_call.1} parent=1 // pred_fallthru
      _
    // Predicated region
    $region18: #{tpu_custom_call.1} parent=1 // pred_check
      _
    $region19: #{tpu_custom_call.1} parent=1 // pred_check_branch
      %39 = sbr.rel (0) target = $region21
    $region20: #{tpu_custom_call.1} parent=1 // pred_region
      %40 = dma.done [#allocation4], 384
    $region21: #{tpu_custom_call.1} parent=1 // pred_fallthru
      _
    // Predicated region
    $region22: #{tpu_custom_call.1} parent=1 // pred_check
      _
    $region23: #{tpu_custom_call.1} parent=1 // pred_check_branch
      %42 = sbr.rel (0) target = $region25
    $region24: #{tpu_custom_call.1} parent=1 // pred_region
      %43 = dma.done [#allocation6], 4864
    $region25: #{tpu_custom_call.1} parent=1 // pred_fallthru
      _
    %v45 = vld [vmem:[#allocation3] sm:$0xff]
    %v46 = vld [vmem:[#allocation3 + $0x8] sm:$0xff]
    %v47 = vld [vmem:[#allocation3 + $0x10] sm:$0xff]
    %v48 = vpack.c.bf16 %v45, %v45
    %v49 = vpack.c.bf16 %v46, %v46
    %v50 = vpack.c.bf16 %v47, %v47
    %v51 = vld [vmem:[%s2] sm:$0xf]
    %v52 = vld [vmem:[#allocation5] sm:$0xff]
    %v53 = vld [vmem:[#allocation5 + $0x8] sm:$0xff]
    %v54 = vld [vmem:[#allocation5 + $0x10] sm:$0xff]
    %v55 = vld [vmem:[#allocation5 + $0x18] sm:$0xff]
    %v56 = vld [vmem:[#allocation5 + $0x20] sm:$0xff]
    %v57 = vld [vmem:[#allocation5 + $0x28] sm:$0xff]
    %v58 = vld [vmem:[#allocation5 + $0x30] sm:$0xff]
    %v59 = vld [vmem:[#allocation5 + $0x38] sm:$0xff]
    %v60 = vld [vmem:[#allocation5 + $0x40] sm:$0xff]
    %v61 = vld [vmem:[#allocation5 + $0x48] sm:$0xff]
    %v62 = vld [vmem:[#allocation5 + $0x50] sm:$0xff]
    %v63 = vld [vmem:[#allocation5 + $0x58] sm:$0xff]
    %v64 = vld [vmem:[#allocation5 + $0x60] sm:$0xff]
    %v65 = vld [vmem:[#allocation5 + $0x68] sm:$0xff]
    %v66 = vld [vmem:[#allocation5 + $0x70] sm:$0xff]
    %v67 = vld [vmem:[#allocation5 + $0x78] sm:$0xff]
    %v68 = vld [vmem:[#allocation5 + $0x80] sm:$0xff]
    %v69 = vld [vmem:[#allocation5 + $0x88] sm:$0xff]
    %v70 = vld [vmem:[#allocation5 + $0x90] sm:$0xff]
    %v71 = vld [vmem:[#allocation5 + $0x98] sm:$0xff]
    %v72 = vld [vmem:[#allocation5 + $0xa0] sm:$0xff]
    %v73 = vld [vmem:[#allocation5 + $0xa8] sm:$0xff]
    %v74 = vld [vmem:[#allocation5 + $0xb0] sm:$0xff]
    %v75 = vld [vmem:[#allocation5 + $0xb8] sm:$0xff]
    %v76 = vld [vmem:[#allocation5 + $0xc0] sm:$0xff]
    %v77 = vld [vmem:[#allocation5 + $0xc8] sm:$0xff]
    %v78 = vld [vmem:[#allocation5 + $0xd0] sm:$0xff]
    %v79 = vld [vmem:[#allocation5 + $0xd8] sm:$0xff]
    %v80 = vld [vmem:[#allocation5 + $0xe0] sm:$0xff]
    %v81 = vld [vmem:[#allocation5 + $0xe8] sm:$0xff]
    %v82 = vld [vmem:[#allocation5 + $0xf0] sm:$0xff]
    %v83 = vld [vmem:[#allocation5 + $0xf8] sm:$0xff]
    %v84 = vld [vmem:[#allocation5 + $0x100] sm:$0xff]
    %v85 = vld [vmem:[#allocation5 + $0x108] sm:$0xff]
    %v86 = vld [vmem:[#allocation5 + $0x110] sm:$0xff]
    %v87 = vld [vmem:[#allocation5 + $0x118] sm:$0xff]
    %v88 = vld [vmem:[#allocation5 + $0x120] sm:$0xff]
    %v89 = vld [vmem:[#allocation5 + $0x128] sm:$0x33]
    %v91 = vlaneseq
    %v92 = vshrl.u32 %v91, 7
    %v93 = vsub.s32 0, %v92
    %v94 = vrot.slane %v51, %v93
    %v95 = vlaneseq
    %v96 = vshrl.u32 %v95, 7
    %v97 = vsub.s32 2, %v96
    %v98 = vrot.slane %v51, %v97
    %v101 = vlaneseq
    %v102 = vshrl.u32 %v101, 7
    %v103 = vsub.s32 0, %v102
    %v104 = vrot.slane %v94, %v103
    %v105 = vlaneseq
    %v106 = vshrl.u32 %v105, 7
    %v107 = vsub.s32 0, %v106
    %v108 = vrot.slane %v98, %v107
    %v147 = vunpack.c.l.b16 %v52
    %v148 = vunpack.c.h.b16 %v52
    %v149 = vunpack.c.l.b16 %v53
    %v150 = vunpack.c.h.b16 %v53
    %v151 = vunpack.c.l.b16 %v54
    %v152 = vunpack.c.h.b16 %v54
    %v153 = vunpack.c.l.b16 %v55
    %v154 = vunpack.c.h.b16 %v55
    %v155 = vunpack.c.l.b16 %v56
    %v156 = vunpack.c.h.b16 %v56
    %v157 = vunpack.c.l.b16 %v57
    %v158 = vunpack.c.h.b16 %v57
    %v159 = vunpack.c.l.b16 %v58
    %v160 = vunpack.c.h.b16 %v58
    %v161 = vunpack.c.l.b16 %v59
    %v162 = vunpack.c.h.b16 %v59
    %v163 = vunpack.c.l.b16 %v60
    %v164 = vunpack.c.h.b16 %v60
    %v165 = vunpack.c.l.b16 %v61
    %v166 = vunpack.c.h.b16 %v61
    %v167 = vunpack.c.l.b16 %v62
    %v168 = vunpack.c.h.b16 %v62
    %v169 = vunpack.c.l.b16 %v63
    %v170 = vunpack.c.h.b16 %v63
    %v171 = vunpack.c.l.b16 %v64
    %v172 = vunpack.c.h.b16 %v64
    %v173 = vunpack.c.l.b16 %v65
    %v174 = vunpack.c.h.b16 %v65
    %v175 = vunpack.c.l.b16 %v66
    %v176 = vunpack.c.h.b16 %v66
    %v177 = vunpack.c.l.b16 %v67
    %v178 = vunpack.c.h.b16 %v67
    %v179 = vunpack.c.l.b16 %v68
    %v180 = vunpack.c.h.b16 %v68
    %v181 = vunpack.c.l.b16 %v69
    %v182 = vunpack.c.h.b16 %v69
    %v183 = vunpack.c.l.b16 %v70
    %v184 = vunpack.c.h.b16 %v70
    %v185 = vunpack.c.l.b16 %v71
    %v186 = vunpack.c.h.b16 %v71
    %v187 = vunpack.c.l.b16 %v72
    %v188 = vunpack.c.h.b16 %v72
    %v189 = vunpack.c.l.b16 %v73
    %v190 = vunpack.c.h.b16 %v73
    %v191 = vunpack.c.l.b16 %v74
    %v192 = vunpack.c.h.b16 %v74
    %v193 = vunpack.c.l.b16 %v75
    %v194 = vunpack.c.h.b16 %v75
    %v195 = vunpack.c.l.b16 %v76
    %v196 = vunpack.c.h.b16 %v76
    %v197 = vunpack.c.l.b16 %v77
    %v198 = vunpack.c.h.b16 %v77
    %v199 = vunpack.c.l.b16 %v78
    %v200 = vunpack.c.h.b16 %v78
    %v201 = vunpack.c.l.b16 %v79
    %v202 = vunpack.c.h.b16 %v79
    %v203 = vunpack.c.l.b16 %v80
    %v204 = vunpack.c.h.b16 %v80
    %v205 = vunpack.c.l.b16 %v81
    %v206 = vunpack.c.h.b16 %v81
    %v207 = vunpack.c.l.b16 %v82
    %v208 = vunpack.c.h.b16 %v82
    %v209 = vunpack.c.l.b16 %v83
    %v210 = vunpack.c.h.b16 %v83
    %v211 = vunpack.c.l.b16 %v84
    %v212 = vunpack.c.h.b16 %v84
    %v213 = vunpack.c.l.b16 %v85
    %v214 = vunpack.c.h.b16 %v85
    %v215 = vunpack.c.l.b16 %v86
    %v216 = vunpack.c.h.b16 %v86
    %v217 = vunpack.c.l.b16 %v87
    %v218 = vunpack.c.h.b16 %v87
    %v219 = vunpack.c.l.b16 %v88
    %v220 = vunpack.c.h.b16 %v88
    %v221 = vunpack.c.l.b16 %v89
    %v222 = vunpack.c.h.b16 %v89
    %v223 = vpack.c.b16 %v149, %v147
    %v224 = vpack.c.b16 %v150, %v148
    %v225 = vpack.c.b16 %v153, %v151
    %v226 = vpack.c.b16 %v154, %v152
    %v227 = vpack.c.b16 %v157, %v155
    %v228 = vpack.c.b16 %v158, %v156
    %v229 = vpack.c.b16 %v161, %v159
    %v230 = vpack.c.b16 %v162, %v160
    %v231 = vpack.c.b16 %v165, %v163
    %v232 = vpack.c.b16 %v166, %v164
    %v233 = vpack.c.b16 %v169, %v167
    %v234 = vpack.c.b16 %v170, %v168
    %v235 = vpack.c.b16 %v173, %v171
    %v236 = vpack.c.b16 %v174, %v172
    %v237 = vpack.c.b16 %v177, %v175
    %v238 = vpack.c.b16 %v178, %v176
    %v239 = vpack.c.b16 %v181, %v179
    %v240 = vpack.c.b16 %v182, %v180
    %v241 = vpack.c.b16 %v185, %v183
    %v242 = vpack.c.b16 %v186, %v184
    %v243 = vpack.c.b16 %v189, %v187
    %v244 = vpack.c.b16 %v190, %v188
    %v245 = vpack.c.b16 %v193, %v191
    %v246 = vpack.c.b16 %v194, %v192
    %v247 = vpack.c.b16 %v197, %v195
    %v248 = vpack.c.b16 %v198, %v196
    %v249 = vpack.c.b16 %v201, %v199
    %v250 = vpack.c.b16 %v202, %v200
    %v251 = vpack.c.b16 %v205, %v203
    %v252 = vpack.c.b16 %v206, %v204
    %v253 = vpack.c.b16 %v209, %v207
    %v254 = vpack.c.b16 %v210, %v208
    %v255 = vpack.c.b16 %v213, %v211
    %v256 = vpack.c.b16 %v214, %v212
    %v257 = vpack.c.b16 %v217, %v215
    %v258 = vpack.c.b16 %v218, %v216
    %v259 = vpack.c.b16 %v221, %v219
    %v260 = vpack.c.b16 %v222, %v220
    %vm297 = vcmask 359424
    %v299 = vsel %vm297, %v50, 0
    %vm301 = vcmask 1045504
    %v303 = vsel %vm301, %v259, 0
    %v306 = vsel %vm301, %v260, 0
    %308 = vmatprep.subr.bf16.mxu0 %v224
    %309 = vmatpush1.bf16.msra.mxu0 %v223
    %310 = vmatprep.subr.bf16.mxu0 %v226
    %311 = vmatpush1.bf16.msra.mxu0 %v225
    %312 = vmatprep.subr.bf16.mxu0 %v228
    %313 = vmatpush1.bf16.msra.mxu0 %v227
    %314 = vmatprep.subr.bf16.mxu0 %v230
    %315 = vmatpush1.bf16.msra.mxu0 %v229
    %316 = vmatprep.subr.bf16.mxu0 %v232
    %317 = vmatpush1.bf16.msra.mxu0 %v231
    %318 = vmatprep.subr.bf16.mxu0 %v234
    %319 = vmatpush1.bf16.msra.mxu0 %v233
    %320 = vmatprep.subr.bf16.mxu0 %v236
    %321 = vmatpush1.bf16.msra.mxu0 %v235
    %322 = vmatprep.subr.bf16.mxu0 %v238
    %323 = vmatpush1.bf16.msra.mxu0 %v237
    %324 = vmatprep.subr.bf16.mxu0 %v240
    %325 = vmatpush1.bf16.msra.mxu0 %v239
    %326 = vmatprep.subr.bf16.mxu0 %v242
    %327 = vmatpush1.bf16.msra.mxu0 %v241
    %328 = vmatprep.subr.bf16.mxu0 %v244
    %329 = vmatpush1.bf16.msra.mxu0 %v243
    %330 = vmatprep.subr.bf16.mxu0 %v246
    %331 = vmatpush1.bf16.msra.mxu0 %v245
    %332 = vmatprep.subr.bf16.mxu0 %v248
    %333 = vmatpush1.bf16.msra.mxu0 %v247
    %334 = vmatprep.subr.bf16.mxu0 %v250
    %335 = vmatpush1.bf16.msra.mxu0 %v249
    %336 = vmatprep.subr.bf16.mxu0 %v252
    %337 = vmatpush1.bf16.msra.mxu0 %v251
    %338 = vmatprep.subr.bf16.mxu0 %v254
    %339 = vmatpush1.bf16.msra.mxu0 %v253
    %340 = vmatprep.mubr.bf16.mxu0 %v49
    %341 = vmatmul.mubr.bf16.gmra.mrb[0].mxu0 %v48
    %v342 = vpop.f32.mrb[0].mxu0
    %v343 = vadd.f32 %v104, %v342
    %v344 = vpop.f32.mrb[0].mxu0
    %v345 = vadd.f32 %v108, %v344
    %v346 = vpop.f32.mrb[0].mxu0
    %v347 = vpop.f32.mrb[0].mxu0
    %348 = vdwg.mxu0
    %349 = vmatprep.subr.bf16.mxu0 %v256
    %350 = vmatpush1.bf16.msra.mxu0 %v255
    %351 = vmatprep.subr.bf16.mxu0 %v258
    %352 = vmatpush1.bf16.msra.mxu0 %v257
    %353 = vmatprep.subr.bf16.mxu0 %v306
    %354 = vmatpush1.bf16.msra.mxu0 %v303
    %355 = vmatprep.subr.bf16.mxu0 0
    %356 = vmatpush1.bf16.msra.mxu0 0
    %357 = vmatprep.subr.bf16.mxu0 0
    %358 = vmatpush1.bf16.msra.mxu0 0
    %359 = vmatprep.subr.bf16.mxu0 0
    %360 = vmatpush1.bf16.msra.mxu0 0
    %361 = vmatprep.subr.bf16.mxu0 0
    %362 = vmatpush1.bf16.msra.mxu0 0
    %363 = vmatprep.subr.bf16.mxu0 0
    %364 = vmatpush1.bf16.msra.mxu0 0
    %365 = vmatprep.subr.bf16.mxu0 0
    %366 = vmatpush1.bf16.msra.mxu0 0
    %367 = vmatprep.subr.bf16.mxu0 0
    %368 = vmatpush1.bf16.msra.mxu0 0
    %369 = vmatprep.subr.bf16.mxu0 0
    %370 = vmatpush1.bf16.msra.mxu0 0
    %371 = vmatprep.subr.bf16.mxu0 0
    %372 = vmatpush1.bf16.msra.mxu0 0
    %373 = vmatprep.subr.bf16.mxu0 0
    %374 = vmatpush1.bf16.msra.mxu0 0
    %375 = vmatprep.subr.bf16.mxu0 0
    %376 = vmatpush1.bf16.msra.mxu0 0
    %377 = vmatprep.subr.bf16.mxu0 0
    %378 = vmatpush1.bf16.msra.mxu0 0
    %379 = vmatprep.subr.bf16.mxu0 0
    %380 = vmatpush1.bf16.msra.mxu0 0
    %381 = vmatprep.mubr.bf16.mxu0 0
    %382 = vmatmul.mubr.bf16.gmra.mrb[0].mxu0 %v299
    %v383 = vpop.f32.mrb[0].mxu0
    %v384 = vadd.f32 %v343, %v383
    %v385 = vpop.f32.mrb[0].mxu0
    %v386 = vadd.f32 %v345, %v385
    %v387 = vpop.f32.mrb[0].mxu0
    %v388 = vpop.f32.mrb[0].mxu0
    %389 = vdwg.mxu0
    %v390 = vmax.f32 %v384, 0.0
    %v391 = vmax.f32 %v386, 0.0
    %v392 = vlaneseq
    %v393 = vshrl.u32 %v392, 7
    %v394 = vsub.s32 1, %v393
    %v395 = vrot.slane %v51, %v394
    %v396 = vlaneseq
    %v397 = vshrl.u32 %v396, 7
    %v398 = vsub.s32 3, %v397
    %v399 = vrot.slane %v51, %v398
    %v402 = vlaneseq
    %v403 = vshrl.u32 %v402, 7
    %v404 = vsub.s32 1, %v403
    %v405 = vrot.slane %v395, %v404
    %v406 = vlaneseq
    %v407 = vshrl.u32 %v406, 7
    %v408 = vsub.s32 1, %v407
    %v409 = vrot.slane %v399, %v408
    %v410 = vmul.f32 %v390, %v405
    %v411 = vmul.f32 %v391, %v409
    %v412 = vadd.f32 %v410, %v411
    %413 = vadd.xlane.f32.xlu0 %v412
    %v414 = vpop.xlane.xlu0 %413
    %s415 = sld [smem:[#allocation2]]
    %v416 = vstv %s415
    %v417 = vadd.f32 %v414, %v416
    %vm418 = vcmask 7168
    %419 = vst.msk [vmem:[%s4] sm:$0xff] %vm418, %v417
    // Predicated region
    $region26: #{tpu_custom_call.1} parent=1 // pred_check
      _
    $region27: #{tpu_custom_call.1} parent=1 // pred_check_branch
      %421 = sbr.rel (0) target = $region29
    $region28: #{tpu_custom_call.1} parent=1 // pred_region
      _
    $region29: #{tpu_custom_call.1} parent=1 // pred_fallthru
      _
    // Predicated region
    $region30: #{tpu_custom_call.1} parent=1 // pred_check
      _
    $region31: #{tpu_custom_call.1} parent=1 // pred_check_branch
      %423 = sbr.rel (0) target = $region33
    $region32: #{tpu_custom_call.1} parent=1 // pred_region
      _
    $region33: #{tpu_custom_call.1} parent=1 // pred_fallthru
      _
    %424 = vsyncpa [#allocation4], 1
    %425 = vsyncpa [#allocation6], 1

</llo_original>
